<compile_context>
chip_gen: v5e
topology: v5e:2x2
jax: 0.10.0
libtpu: 0.0.40
codegen_flags: <defaults>
</compile_context>

<pallas_src>
import jax
import jax.numpy as jnp
from jax.experimental import pallas as pl
from jax.experimental.pallas import tpu as pltpu

# ----------------------------- model sizes ---------------------------------
B = 2             # batch
C_IN = 3          # RGB
H = W = 16        # spatial
P = 2             # patch size for the backbone stand-in
S = (H // P) * (W // P)          # 64 spatial positions after patchify
BS = B * S                       # 128 flattened (batch*seq) rows -> full MXU height
K = P * P * C_IN                 # 12 features per patch
C_FEAT = 128      # image feature channels (stand-in for EfficientNet-b2's 1408)
T_IN = 6          # text feature dim (nn.Linear(6, 128))
T_H1 = 128
T_H2 = 64
C_H = 256         # classifier hidden
NUM_CLASSES = 5
OUT_PAD = 128     # lane-dense padded classifier output width

# --------------------- packed weight slab layout (rows) ---------------------
# Single f32 slab of shape (SLAB_ROWS, SLAB_COLS); every tensor starts at an
# 8-aligned row and at lane 0 (zero padding elsewhere).
R_WP = 0                         # (K, C_FEAT)            rows   0..11
R_WT1 = 16                       # (T_IN, T_H1)           rows  16..21
R_WT2 = 24                       # (T_H1, T_H2)           rows  24..151
R_WC1I = 152                     # (C_FEAT, C_H)          rows 152..279
R_WC1T = R_WC1I + C_FEAT         # (T_H2, C_H)            rows 280..343
R_WC2 = 344                      # (C_H, OUT_PAD)         rows 344..599
R_POOL = 600                     # (B, BS) pooling matrix rows 600..601
R_BIAS = 608                     # bp, bt1, bt2, bc1, bc2 rows 608..612
SLAB_ROWS = 616
SLAB_COLS = 256


# ------------------------------ Pallas kernel ------------------------------
def multimodal_kernel(patches_ref, text_ref, w_ref, out_ref):
    # patches_ref: (BS, K)  flattened image patches
    # text_ref:    (B, T_IN)
    # w_ref:       (SLAB_ROWS, SLAB_COLS) packed weights / biases / pool matrix
    # out_ref:     (B, OUT_PAD) lane-dense padded logits

    # --- image path: patch projection (backbone stand-in) + ReLU -----------
    patches = patches_ref[...]                                   # (128, 12)
    wp = w_ref[R_WP:R_WP + K, 0:C_FEAT]                          # (12, 128)
    bp = w_ref[R_BIAS + 0:R_BIAS + 1, 0:C_FEAT]                  # (1, 128)
    feat = jnp.dot(patches, wp, preferred_element_type=jnp.float32)
    feat = jnp.maximum(feat + bp, 0.0)                           # (128, 128)

    # --- AdaptiveAvgPool2d((1,1)) as a pooling matmul (1/S folded in) -------
    pool = w_ref[R_POOL:R_POOL + B, 0:BS]                        # (B, 128)
    img_feat = jnp.dot(pool, feat, preferred_element_type=jnp.float32)  # (B, 128)

    # --- text encoder: Linear(6,128) -> ReLU -> Linear(128,64) -> ReLU ------
    t = text_ref[...]                                            # (B, 6)
    wt1 = w_ref[R_WT1:R_WT1 + T_IN, 0:T_H1]                      # (6, 128)
    bt1 = w_ref[R_BIAS + 1:R_BIAS + 2, 0:T_H1]                   # (1, 128)
    h1 = jnp.maximum(
        jnp.dot(t, wt1, preferred_element_type=jnp.float32) + bt1, 0.0)
    wt2 = w_ref[R_WT2:R_WT2 + T_H1, 0:T_H2]                      # (128, 64)
    bt2 = w_ref[R_BIAS + 2:R_BIAS + 3, 0:T_H2]                   # (1, 64)
    txt_feat = jnp.maximum(
        jnp.dot(h1, wt2, preferred_element_type=jnp.float32) + bt2, 0.0)  # (B, 64)

    # --- classifier on concat(img_feat, txt_feat) ---------------------------
    # concat folded into split weights: [img|txt] @ [[Wi],[Wt]] = img@Wi + txt@Wt
    wc1i = w_ref[R_WC1I:R_WC1I + C_FEAT, 0:C_H]                  # (128, 256)
    wc1t = w_ref[R_WC1T:R_WC1T + T_H2, 0:C_H]                    # (64, 256)
    bc1 = w_ref[R_BIAS + 3:R_BIAS + 4, 0:C_H]                    # (1, 256)
    c1 = (jnp.dot(img_feat, wc1i, preferred_element_type=jnp.float32)
          + jnp.dot(txt_feat, wc1t, preferred_element_type=jnp.float32)
          + bc1)
    c1 = jnp.maximum(c1, 0.0)                                    # (B, 256)

    wc2 = w_ref[R_WC2:R_WC2 + C_H, 0:OUT_PAD]                    # (256, 128) (cols >=5 are 0)
    bc2 = w_ref[R_BIAS + 4:R_BIAS + 5, 0:OUT_PAD]                # (1, 128)
    logits = jnp.dot(c1, wc2, preferred_element_type=jnp.float32) + bc2   # (B, 128)
    out_ref[...] = logits.astype(out_ref.dtype)


# ------------------------------ wrapper -------------------------------------
def pack_params(p):
    """Pack all weights/biases + the static pooling matrix into one slab (done once)."""
    slab = jnp.zeros((SLAB_ROWS, SLAB_COLS), jnp.float32)
    slab = slab.at[R_WP:R_WP + K, 0:C_FEAT].set(p["wp"])
    slab = slab.at[R_WT1:R_WT1 + T_IN, 0:T_H1].set(p["wt1"])
    slab = slab.at[R_WT2:R_WT2 + T_H1, 0:T_H2].set(p["wt2"])
    slab = slab.at[R_WC1I:R_WC1I + C_FEAT, 0:C_H].set(p["wc1i"])
    slab = slab.at[R_WC1T:R_WC1T + T_H2, 0:C_H].set(p["wc1t"])
    slab = slab.at[R_WC2:R_WC2 + C_H, 0:NUM_CLASSES].set(p["wc2"])
    slab = slab.at[R_BIAS + 0:R_BIAS + 1, 0:C_FEAT].set(p["bp"])
    slab = slab.at[R_BIAS + 1:R_BIAS + 2, 0:T_H1].set(p["bt1"])
    slab = slab.at[R_BIAS + 2:R_BIAS + 3, 0:T_H2].set(p["bt2"])
    slab = slab.at[R_BIAS + 3:R_BIAS + 4, 0:C_H].set(p["bc1"])
    slab = slab.at[R_BIAS + 4:R_BIAS + 5, 0:NUM_CLASSES].set(p["bc2"])
    # pool[b, r] = 1/S if row r belongs to batch b else 0  (1/S scale folded in).
    pool = jnp.kron(jnp.eye(B, dtype=jnp.float32),
                    jnp.full((1, S), 1.0 / S, jnp.float32))      # (B, B*S)
    slab = slab.at[R_POOL:R_POOL + B, 0:BS].set(pool)
    return slab


def multimodal_forward(image_nchw, text, w_slab):
    """image_nchw: (B, 3, H, W) float32 ; text: (B, 6) float32."""
    b = image_nchw.shape[0]
    # NCHW -> NHWC -> non-overlapping PxP patches -> flat (B*S, P*P*C) rows
    img = jnp.transpose(image_nchw, (0, 2, 3, 1))                      # (B,H,W,C)
    img = img.reshape(b, H // P, P, W // P, P, C_IN)
    patches = jnp.transpose(img, (0, 1, 3, 2, 4, 5)).reshape(b * S, K)  # (B*S, K)

    vmem = pl.BlockSpec(memory_space=pltpu.MemorySpace.VMEM)
    out_padded = pl.pallas_call(
        multimodal_kernel,
        out_shape=jax.ShapeDtypeStruct((b, OUT_PAD), jnp.float32),
        in_specs=[vmem, vmem, vmem],
        out_specs=vmem,
    )(patches, text, w_slab)
    return out_padded[:, :NUM_CLASSES]


# --------------------------- deterministic params ---------------------------
def init_params(key):
    ks = jax.random.split(key, 8)

    def lin(k, fan_in, fan_out):
        scale = 1.0 / jnp.sqrt(jnp.float32(fan_in))
        return jax.random.uniform(k, (fan_in, fan_out), jnp.float32, -scale, scale)

    return {
        "wp":   lin(ks[0], K, C_FEAT),
        "bp":   jnp.zeros((1, C_FEAT), jnp.float32),
        "wt1":  lin(ks[1], T_IN, T_H1),
        "bt1":  0.01 * jnp.ones((1, T_H1), jnp.float32),
        "wt2":  lin(ks[2], T_H1, T_H2),
        "bt2":  0.01 * jnp.ones((1, T_H2), jnp.float32),
        "wc1i": lin(ks[3], C_FEAT, C_H),
        "wc1t": lin(ks[4], T_H2, C_H),
        "bc1":  0.01 * jnp.ones((1, C_H), jnp.float32),
        "wc2":  lin(ks[5], C_H, NUM_CLASSES),
        "bc2":  jnp.zeros((1, NUM_CLASSES), jnp.float32),
    }


# --------------------------- pure-JAX reference -----------------------------
def reference_forward(image_nchw, text, p):
    b = image_nchw.shape[0]
    img = jnp.transpose(image_nchw, (0, 2, 3, 1))
    img = img.reshape(b, H // P, P, W // P, P, C_IN)
    patches = jnp.transpose(img, (0, 1, 3, 2, 4, 5)).reshape(b, S, K)
    feat = jnp.maximum(jnp.einsum("bsk,kc->bsc", patches, p["wp"]) + p["bp"], 0.0)
    img_feat = jnp.mean(feat, axis=1)
    h1 = jnp.maximum(text @ p["wt1"] + p["bt1"], 0.0)
    txt_feat = jnp.maximum(h1 @ p["wt2"] + p["bt2"], 0.0)
    comb = jnp.concatenate([img_feat, txt_feat], axis=1)
    wc1 = jnp.concatenate([p["wc1i"], p["wc1t"]], axis=0)
    c1 = jnp.maximum(comb @ wc1 + p["bc1"], 0.0)
    return c1 @ p["wc2"] + p["bc2"]


if __name__ == "__main__":
    key = jax.random.PRNGKey(0)
    k_img, k_txt, k_par = jax.random.split(key, 3)

    image = jax.random.normal(k_img, (B, C_IN, H, W), jnp.float32)  # NCHW input
    text = jax.random.normal(k_txt, (B, T_IN), jnp.float32)
    params = init_params(k_par)
    w_slab = pack_params(params)             # packed once, reused every call

    out = multimodal_forward(image, text, w_slab)
    out = jax.block_until_ready(out)
    assert out.shape == (B, NUM_CLASSES)
    assert bool(jnp.all(jnp.isfinite(out)))

    ref = reference_forward(image, text, params)
    max_err = float(jnp.max(jnp.abs(out - ref)))
    assert max_err < 5e-2, f"kernel/reference mismatch: max_err={max_err}"
    print("KERNEL_OK")
</pallas_src>

<mosaic_0001>
module attributes {stable_mosaic.version = 11 : i64} {
  func.func @multimodal_kernel(%arg0: memref<128x12xf32, #tpu.memory_space<vmem>>, %arg1: memref<2x6xf32, #tpu.memory_space<vmem>>, %arg2: memref<616x256xf32, #tpu.memory_space<vmem>>, %arg3: memref<2x128xf32, #tpu.memory_space<vmem>>) attributes {dimension_semantics = [], scalar_prefetch = 0 : i64, scratch_operands = 0 : i64, tpu.core_type = #tpu.core_type<tc>} {
    %c0 = arith.constant 0 : index
    %c0_0 = arith.constant 0 : index
    %0 = vector.load %arg0[%c0, %c0_0] : memref<128x12xf32, #tpu.memory_space<vmem>>, vector<128x12xf32>
    %c0_1 = arith.constant 0 : index
    %c0_2 = arith.constant 0 : index
    %1 = vector.load %arg2[%c0_1, %c0_2] : memref<616x256xf32, #tpu.memory_space<vmem>>, vector<12x128xf32>
    %c608 = arith.constant 608 : index
    %c0_3 = arith.constant 0 : index
    %2 = vector.load %arg2[%c608, %c0_3] : memref<616x256xf32, #tpu.memory_space<vmem>>, vector<1x128xf32>
    %cst = arith.constant dense<0.000000e+00> : vector<128x128xf32>
    %3 = tpu.matmul %0, %1, %cst {dimension_numbers = #tpu.dot_dimension_numbers<[1], [0], [0], [1], [0, 0, 1, 1], [], []>} : vector<128x12xf32>, vector<12x128xf32>, vector<128x128xf32> -> vector<128x128xf32>
    %4 = vector.broadcast %2 : vector<1x128xf32> to vector<128x128xf32>
    %5 = arith.addf %3, %4 : vector<128x128xf32>
    %cst_4 = arith.constant 0.000000e+00 : f32
    %6 = vector.broadcast %cst_4 : f32 to vector<128x128xf32>
    %7 = arith.maximumf %5, %6 : vector<128x128xf32>
    %c600 = arith.constant 600 : index
    %c0_5 = arith.constant 0 : index
    %8 = vector.load %arg2[%c600, %c0_5] : memref<616x256xf32, #tpu.memory_space<vmem>>, vector<2x128xf32>
    %cst_6 = arith.constant dense<0.000000e+00> : vector<2x128xf32>
    %9 = tpu.matmul %8, %7, %cst_6 {dimension_numbers = #tpu.dot_dimension_numbers<[1], [0], [0], [1], [0, 0, 1, 1], [], []>} : vector<2x128xf32>, vector<128x128xf32>, vector<2x128xf32> -> vector<2x128xf32>
    %c0_7 = arith.constant 0 : index
    %c0_8 = arith.constant 0 : index
    %10 = vector.load %arg1[%c0_7, %c0_8] : memref<2x6xf32, #tpu.memory_space<vmem>>, vector<2x6xf32>
    %c16 = arith.constant 16 : index
    %c0_9 = arith.constant 0 : index
    %11 = vector.load %arg2[%c16, %c0_9] : memref<616x256xf32, #tpu.memory_space<vmem>>, vector<6x128xf32>
    %c609 = arith.constant 609 : index
    %c0_10 = arith.constant 0 : index
    %12 = vector.load %arg2[%c609, %c0_10] : memref<616x256xf32, #tpu.memory_space<vmem>>, vector<1x128xf32>
    %cst_11 = arith.constant dense<0.000000e+00> : vector<2x128xf32>
    %13 = tpu.matmul %10, %11, %cst_11 {dimension_numbers = #tpu.dot_dimension_numbers<[1], [0], [0], [1], [0, 0, 1, 1], [], []>} : vector<2x6xf32>, vector<6x128xf32>, vector<2x128xf32> -> vector<2x128xf32>
    %14 = vector.broadcast %12 : vector<1x128xf32> to vector<2x128xf32>
    %15 = arith.addf %13, %14 : vector<2x128xf32>
    %cst_12 = arith.constant 0.000000e+00 : f32
    %16 = vector.broadcast %cst_12 : f32 to vector<2x128xf32>
    %17 = arith.maximumf %15, %16 : vector<2x128xf32>
    %c24 = arith.constant 24 : index
    %c0_13 = arith.constant 0 : index
    %18 = vector.load %arg2[%c24, %c0_13] : memref<616x256xf32, #tpu.memory_space<vmem>>, vector<128x64xf32>
    %c610 = arith.constant 610 : index
    %c0_14 = arith.constant 0 : index
    %19 = vector.load %arg2[%c610, %c0_14] : memref<616x256xf32, #tpu.memory_space<vmem>>, vector<1x64xf32>
    %cst_15 = arith.constant dense<0.000000e+00> : vector<2x64xf32>
    %20 = tpu.matmul %17, %18, %cst_15 {dimension_numbers = #tpu.dot_dimension_numbers<[1], [0], [0], [1], [0, 0, 1, 1], [], []>} : vector<2x128xf32>, vector<128x64xf32>, vector<2x64xf32> -> vector<2x64xf32>
    %21 = vector.broadcast %19 : vector<1x64xf32> to vector<2x64xf32>
    %22 = arith.addf %20, %21 : vector<2x64xf32>
    %cst_16 = arith.constant 0.000000e+00 : f32
    %23 = vector.broadcast %cst_16 : f32 to vector<2x64xf32>
    %24 = arith.maximumf %22, %23 : vector<2x64xf32>
    %c152 = arith.constant 152 : index
    %c0_17 = arith.constant 0 : index
    %25 = vector.load %arg2[%c152, %c0_17] : memref<616x256xf32, #tpu.memory_space<vmem>>, vector<128x256xf32>
    %c280 = arith.constant 280 : index
    %c0_18 = arith.constant 0 : index
    %26 = vector.load %arg2[%c280, %c0_18] : memref<616x256xf32, #tpu.memory_space<vmem>>, vector<64x256xf32>
    %c611 = arith.constant 611 : index
    %c0_19 = arith.constant 0 : index
    %27 = vector.load %arg2[%c611, %c0_19] : memref<616x256xf32, #tpu.memory_space<vmem>>, vector<1x256xf32>
    %cst_20 = arith.constant dense<0.000000e+00> : vector<2x256xf32>
    %28 = tpu.matmul %9, %25, %cst_20 {dimension_numbers = #tpu.dot_dimension_numbers<[1], [0], [0], [1], [0, 0, 1, 1], [], []>} : vector<2x128xf32>, vector<128x256xf32>, vector<2x256xf32> -> vector<2x256xf32>
    %cst_21 = arith.constant dense<0.000000e+00> : vector<2x256xf32>
    %29 = tpu.matmul %24, %26, %cst_21 {dimension_numbers = #tpu.dot_dimension_numbers<[1], [0], [0], [1], [0, 0, 1, 1], [], []>} : vector<2x64xf32>, vector<64x256xf32>, vector<2x256xf32> -> vector<2x256xf32>
    %30 = arith.addf %28, %29 : vector<2x256xf32>
    %31 = vector.broadcast %27 : vector<1x256xf32> to vector<2x256xf32>
    %32 = arith.addf %30, %31 : vector<2x256xf32>
    %cst_22 = arith.constant 0.000000e+00 : f32
    %33 = vector.broadcast %cst_22 : f32 to vector<2x256xf32>
    %34 = arith.maximumf %32, %33 : vector<2x256xf32>
    %c344 = arith.constant 344 : index
    %c0_23 = arith.constant 0 : index
    %35 = vector.load %arg2[%c344, %c0_23] : memref<616x256xf32, #tpu.memory_space<vmem>>, vector<256x128xf32>
    %c612 = arith.constant 612 : index
    %c0_24 = arith.constant 0 : index
    %36 = vector.load %arg2[%c612, %c0_24] : memref<616x256xf32, #tpu.memory_space<vmem>>, vector<1x128xf32>
    %cst_25 = arith.constant dense<0.000000e+00> : vector<2x128xf32>
    %37 = tpu.matmul %34, %35, %cst_25 {dimension_numbers = #tpu.dot_dimension_numbers<[1], [0], [0], [1], [0, 0, 1, 1], [], []>} : vector<2x256xf32>, vector<256x128xf32>, vector<2x128xf32> -> vector<2x128xf32>
    %38 = vector.broadcast %36 : vector<1x128xf32> to vector<2x128xf32>
    %39 = arith.addf %37, %38 : vector<2x128xf32>
    %c0_26 = arith.constant 0 : index
    %c0_27 = arith.constant 0 : index
    %40 = vector.load %arg3[%c0_26, %c0_27] : memref<2x128xf32, #tpu.memory_space<vmem>>, vector<2x128xf32>
    tpu.vector_store %arg3[%c0_26, %c0_27], %39 {strides = array<i32>} : memref<2x128xf32, #tpu.memory_space<vmem>>, vector<2x128xf32>,
    return
  }
}

</mosaic_0001>

<llo_original>
// kernel: tpu_custom_call.1
$region0: #{tpu_custom_call.1}
  #allocation0 [shape = 'u32[]', space=smem, size = 0x4, offset = 0x4, fixed_abs, tag = 'smem constant byte address 0x4 - core index']
  #allocation1 [shape = 'u32[72,128]{1,0:T(1,128)}', space=vmem, size = 0x9000, scoped, tag = 'internal scratch']
  %s0 = inlined_call_operand.vmem [shape: f32[128,12], index: 0, kind: input, shape index: {}]
  %s1 = inlined_call_operand.vmem [shape: f32[2,6], index: 1, kind: input, shape index: {}]
  %s2 = inlined_call_operand.hbm [shape: f32[616,256], index: 2, kind: input, shape index: {}]
  %s3 = inlined_call_operand.hbm [shape: f32[2,128], index: 3, kind: output, shape index: {}]
  %s4 = sld [smem:[#allocation0]]
  $region26: #{tpu_custom_call.1} parent=0
    _
  %s6 = ssub.s32 1, %s4
  %s7 = scalar_select 0, %s6, %s4
  $region1: #{tpu_custom_call.1} parent=0
    #allocation2 [shape = 'u8[630784]{0}', space=vmem, size = 0x9a000, scoped, tag = 'input window, operand 2, single buffered']
    #allocation3 [shape = 's32[1]{0}', space=sflag, size = 0x4, scoped, tag = 'scoped memory for tpu_custom_call.1']
    #allocation4 [shape = 's32[1]{0}', space=sflag, size = 0x4, scoped, tag = 'scoped memory for tpu_custom_call.1']
    #allocation5 [shape = 'u8[1024]{0}', space=vmem, size = 0x400, scoped, tag = 'output window, operand 0, single buffered']
    %8 = vsyncpa [#allocation3], 0
    %9 = vsyncpa [#allocation4], 0
    // Predicated region
    $region2: #{tpu_custom_call.1} parent=1 // pred_check
      _
    $region3: #{tpu_custom_call.1} parent=1 // pred_check_branch
      %11 = sbr.rel (0) target = $region5
    $region4: #{tpu_custom_call.1} parent=1 // pred_region
      _
    $region5: #{tpu_custom_call.1} parent=1 // pred_fallthru
      _
    // Predicated region
    $region6: #{tpu_custom_call.1} parent=1 // pred_check
      _
    $region7: #{tpu_custom_call.1} parent=1 // pred_check_branch
      %13 = sbr.rel (0) target = $region9
    $region8: #{tpu_custom_call.1} parent=1 // pred_region
      _
    $region9: #{tpu_custom_call.1} parent=1 // pred_fallthru
      _
    // Predicated region
    $region10: #{tpu_custom_call.1} parent=1 // pred_check
      _
    $region11: #{tpu_custom_call.1} parent=1 // pred_check_branch
      %15 = sbr.rel (0) target = $region13
    $region12: #{tpu_custom_call.1} parent=1 // pred_region
      %17 = vsyncadd [#allocation3], 0
      %s18 = sshll.u32 %s2, 4
      %s19 = int_to_ptr.hbm [resolvable:$true] %s18
      %s20 = sshll.u32 [#allocation2], 4
      %s21 = int_to_ptr.vmem [resolvable:$true] %s20
      %26 = dma.hbm_to_vmem [thread:$0]  %s19, 19712, %s21, [#allocation3], 256, 256, 16
    $region13: #{tpu_custom_call.1} parent=1 // pred_fallthru
      _
    // Predicated region
    $region14: #{tpu_custom_call.1} parent=1 // pred_check
      _
    $region15: #{tpu_custom_call.1} parent=1 // pred_check_branch
      %28 = sbr.rel (0) target = $region17
    $region16: #{tpu_custom_call.1} parent=1 // pred_region
      %30 = dma.done [#allocation3], 19712
    $region17: #{tpu_custom_call.1} parent=1 // pred_fallthru
      _
    %v31 = vld [vmem:[%s0] sm:$0xff]
    %v32 = vld [vmem:[%s0 + $0x8] sm:$0xff]
    %v33 = vld [vmem:[%s0 + $0x10] sm:$0xff]
    %v34 = vld [vmem:[%s0 + $0x18] sm:$0xff]
    %v35 = vld [vmem:[%s0 + $0x20] sm:$0xff]
    %v36 = vld [vmem:[%s0 + $0x28] sm:$0xff]
    %v37 = vld [vmem:[%s0 + $0x30] sm:$0xff]
    %v38 = vld [vmem:[%s0 + $0x38] sm:$0xff]
    %v39 = vld [vmem:[%s0 + $0x40] sm:$0xff]
    %v40 = vld [vmem:[%s0 + $0x48] sm:$0xff]
    %v41 = vld [vmem:[%s0 + $0x50] sm:$0xff]
    %v42 = vld [vmem:[%s0 + $0x58] sm:$0xff]
    %v43 = vld [vmem:[%s0 + $0x60] sm:$0xff]
    %v44 = vld [vmem:[%s0 + $0x68] sm:$0xff]
    %v45 = vld [vmem:[%s0 + $0x70] sm:$0xff]
    %v46 = vld [vmem:[%s0 + $0x78] sm:$0xff]
    %v47 = vld [vmem:[#allocation2] sm:$0xff]
    %v48 = vld [vmem:[#allocation2 + $0x10] sm:$0xf]
    %v49 = vld [vmem:[#allocation2 + $0x4c0] ss:$0 sm:$0xff]
    %vm50 = vcmask 97280
    %v52 = vsel %vm50, %v31, 0
    %v55 = vsel %vm50, %v32, 0
    %v58 = vsel %vm50, %v33, 0
    %v61 = vsel %vm50, %v34, 0
    %v64 = vsel %vm50, %v35, 0
    %v67 = vsel %vm50, %v36, 0
    %v70 = vsel %vm50, %v37, 0
    %v73 = vsel %vm50, %v38, 0
    %v76 = vsel %vm50, %v39, 0
    %v79 = vsel %vm50, %v40, 0
    %v82 = vsel %vm50, %v41, 0
    %v85 = vsel %vm50, %v42, 0
    %v88 = vsel %vm50, %v43, 0
    %v91 = vsel %vm50, %v44, 0
    %v94 = vsel %vm50, %v45, 0
    %v97 = vsel %vm50, %v46, 0
    %vm99 = vcmask 1043456
    %v101 = vsel %vm99, %v48, 0
    %103 = vmatpush.msra.mxu0 0.0
    %104 = vmatpush.msra.mxu0 0.0
    %105 = vmatpush.msra.mxu0 0.0
    %106 = vmatpush.msra.mxu0 0.0
    %107 = vmatpush.msra.mxu0 0.0
    %108 = vmatpush.msra.mxu0 0.0
    %109 = vmatpush.msra.mxu0 0.0
    %110 = vmatpush.msra.mxu0 0.0
    %111 = vmatpush.msra.mxu0 0.0
    %112 = vmatpush.msra.mxu0 0.0
    %113 = vmatpush.msra.mxu0 0.0
    %114 = vmatpush.msra.mxu0 0.0
    %115 = vmatpush.msra.mxu0 0.0
    %116 = vmatpush.msra.mxu0 0.0
    %117 = vmatpush.msra.mxu0 %v101
    %118 = vmatpush.msra.mxu0 %v47
    %119 = vmatmul.f32.gmra.mxu0 %v52
    %v120 = vpop.f32.mrf.mxu0
    %v121 = vadd.f32 %v49, %v120
    %122 = vmatmul.f32.gmra.mxu0 %v55
    %v123 = vpop.f32.mrf.mxu0
    %v124 = vadd.f32 %v49, %v123
    %125 = vmatmul.f32.gmra.mxu0 %v58
    %v126 = vpop.f32.mrf.mxu0
    %v127 = vadd.f32 %v49, %v126
    %128 = vmatmul.f32.gmra.mxu0 %v61
    %v129 = vpop.f32.mrf.mxu0
    %v130 = vadd.f32 %v49, %v129
    %131 = vmatmul.f32.gmra.mxu0 %v64
    %v132 = vpop.f32.mrf.mxu0
    %v133 = vadd.f32 %v49, %v132
    %134 = vmatmul.f32.gmra.mxu0 %v67
    %v135 = vpop.f32.mrf.mxu0
    %v136 = vadd.f32 %v49, %v135
    %137 = vmatmul.f32.gmra.mxu0 %v70
    %v138 = vpop.f32.mrf.mxu0
    %v139 = vadd.f32 %v49, %v138
    %140 = vmatmul.f32.gmra.mxu0 %v73
    %v141 = vpop.f32.mrf.mxu0
    %v142 = vadd.f32 %v49, %v141
    %143 = vmatmul.f32.gmra.mxu0 %v76
    %v144 = vpop.f32.mrf.mxu0
    %v145 = vadd.f32 %v49, %v144
    %146 = vmatmul.f32.gmra.mxu0 %v79
    %v147 = vpop.f32.mrf.mxu0
    %v148 = vadd.f32 %v49, %v147
    %149 = vmatmul.f32.gmra.mxu0 %v82
    %v150 = vpop.f32.mrf.mxu0
    %v151 = vadd.f32 %v49, %v150
    %152 = vmatmul.f32.gmra.mxu0 %v85
    %v153 = vpop.f32.mrf.mxu0
    %v154 = vadd.f32 %v49, %v153
    %155 = vmatmul.f32.gmra.mxu0 %v88
    %v156 = vpop.f32.mrf.mxu0
    %v157 = vadd.f32 %v49, %v156
    %158 = vmatmul.f32.gmra.mxu0 %v91
    %v159 = vpop.f32.mrf.mxu0
    %v160 = vadd.f32 %v49, %v159
    %161 = vmatmul.f32.gmra.mxu0 %v94
    %v162 = vpop.f32.mrf.mxu0
    %v163 = vadd.f32 %v49, %v162
    %164 = vmatmul.f32.gmra.mxu0 %v97
    %v165 = vpop.f32.mrf.mxu0
    %v166 = vadd.f32 %v49, %v165
    %167 = vdwg.mxu0
    %v168 = vmax.f32 %v121, 0.0
    %v169 = vmax.f32 %v124, 0.0
    %v170 = vmax.f32 %v127, 0.0
    %v171 = vmax.f32 %v130, 0.0
    %v172 = vmax.f32 %v133, 0.0
    %v173 = vmax.f32 %v136, 0.0
    %v174 = vmax.f32 %v139, 0.0
    %v175 = vmax.f32 %v142, 0.0
    %v176 = vmax.f32 %v145, 0.0
    %v177 = vmax.f32 %v148, 0.0
    %v178 = vmax.f32 %v151, 0.0
    %v179 = vmax.f32 %v154, 0.0
    %v180 = vmax.f32 %v157, 0.0
    %v181 = vmax.f32 %v160, 0.0
    %v182 = vmax.f32 %v163, 0.0
    %v183 = vmax.f32 %v166, 0.0
    %v184 = vld [vmem:[#allocation2 + $0x4b0] sm:$0x3]
    %185 = vmatpush.msra.mxu0 %v183
    %186 = vmatpush.msra.mxu0 %v182
    %187 = vmatpush.msra.mxu0 %v181
    %188 = vmatpush.msra.mxu0 %v180
    %189 = vmatpush.msra.mxu0 %v179
    %190 = vmatpush.msra.mxu0 %v178
    %191 = vmatpush.msra.mxu0 %v177
    %192 = vmatpush.msra.mxu0 %v176
    %193 = vmatpush.msra.mxu0 %v175
    %194 = vmatpush.msra.mxu0 %v174
    %195 = vmatpush.msra.mxu0 %v173
    %196 = vmatpush.msra.mxu0 %v172
    %197 = vmatpush.msra.mxu0 %v171
    %198 = vmatpush.msra.mxu0 %v170
    %199 = vmatpush.msra.mxu0 %v169
    %200 = vmatpush.msra.mxu0 %v168
    %201 = vmatmul.f32.gmra.mxu0 %v184
    %v202 = vpop.f32.mrf.mxu0
    %v203 = vadd.f32 0.0, %v202
    %204 = vdwg.mxu0
    %v205 = vld [vmem:[%s1] sm:$0x3]
    %v206 = vld [vmem:[#allocation2 + $0x20] sm:$0x3f]
    %v207 = vld [vmem:[#allocation2 + $0x4c1] ss:$0 sm:$0xff]
    %vm208 = vcmask 48128
    %v210 = vsel %vm208, %v205, 0
    %vm212 = vcmask 1045504
    %v214 = vsel %vm212, %v206, 0
    %216 = vmatpush.msra.mxu0 0.0
    %217 = vmatpush.msra.mxu0 0.0
    %218 = vmatpush.msra.mxu0 0.0
    %219 = vmatpush.msra.mxu0 0.0
    %220 = vmatpush.msra.mxu0 0.0
    %221 = vmatpush.msra.mxu0 0.0
    %222 = vmatpush.msra.mxu0 0.0
    %223 = vmatpush.msra.mxu0 0.0
    %224 = vmatpush.msra.mxu0 0.0
    %225 = vmatpush.msra.mxu0 0.0
    %226 = vmatpush.msra.mxu0 0.0
    %227 = vmatpush.msra.mxu0 0.0
    %228 = vmatpush.msra.mxu0 0.0
    %229 = vmatpush.msra.mxu0 0.0
    %230 = vmatpush.msra.mxu0 0.0
    %231 = vmatpush.msra.mxu0 %v214
    %232 = vmatmul.f32.gmra.mxu0 %v210
    %v233 = vpop.f32.mrf.mxu0
    %v234 = vadd.f32 %v207, %v233
    %235 = vdwg.mxu0
    %v236 = vmax.f32 %v234, 0.0
    %v237 = vld [vmem:[#allocation2 + $0x30] sm:$0xff]
    %v238 = vld [vmem:[#allocation2 + $0x40] sm:$0xff]
    %v239 = vld [vmem:[#allocation2 + $0x50] sm:$0xff]
    %v240 = vld [vmem:[#allocation2 + $0x60] sm:$0xff]
    %v241 = vld [vmem:[#allocation2 + $0x70] sm:$0xff]
    %v242 = vld [vmem:[#allocation2 + $0x80] sm:$0xff]
    %v243 = vld [vmem:[#allocation2 + $0x90] sm:$0xff]
    %v244 = vld [vmem:[#allocation2 + $0xa0] sm:$0xff]
    %v245 = vld [vmem:[#allocation2 + $0xb0] sm:$0xff]
    %v246 = vld [vmem:[#allocation2 + $0xc0] sm:$0xff]
    %v247 = vld [vmem:[#allocation2 + $0xd0] sm:$0xff]
    %v248 = vld [vmem:[#allocation2 + $0xe0] sm:$0xff]
    %v249 = vld [vmem:[#allocation2 + $0xf0] sm:$0xff]
    %v250 = vld [vmem:[#allocation2 + $0x100] sm:$0xff]
    %v251 = vld [vmem:[#allocation2 + $0x110] sm:$0xff]
    %v252 = vld [vmem:[#allocation2 + $0x120] sm:$0xff]
    %v253 = vld [vmem:[#allocation2 + $0x4c2] ss:$0 sm:$0xff]
    %254 = vmatpush.msra.mxu0 %v252
    %255 = vmatpush.msra.mxu0 %v251
    %256 = vmatpush.msra.mxu0 %v250
    %257 = vmatpush.msra.mxu0 %v249
    %258 = vmatpush.msra.mxu0 %v248
    %259 = vmatpush.msra.mxu0 %v247
    %260 = vmatpush.msra.mxu0 %v246
    %261 = vmatpush.msra.mxu0 %v245
    %262 = vmatpush.msra.mxu0 %v244
    %263 = vmatpush.msra.mxu0 %v243
    %264 = vmatpush.msra.mxu0 %v242
    %265 = vmatpush.msra.mxu0 %v241
    %266 = vmatpush.msra.mxu0 %v240
    %267 = vmatpush.msra.mxu0 %v239
    %268 = vmatpush.msra.mxu0 %v238
    %269 = vmatpush.msra.mxu0 %v237
    %270 = vmatmul.f32.gmra.mxu0 %v236
    %v271 = vpop.f32.mrf.mxu0
    %v272 = vadd.f32 %v253, %v271
    %273 = vdwg.mxu0
    %v274 = vmax.f32 %v272, 0.0
    %v275 = vld [vmem:[#allocation2 + $0x130] sm:$0xff]
    %v276 = vld [vmem:[#allocation2 + $0x138] sm:$0xff]
    %v277 = vld [vmem:[#allocation2 + $0x140] sm:$0xff]
    %v278 = vld [vmem:[#allocation2 + $0x148] sm:$0xff]
    %v279 = vld [vmem:[#allocation2 + $0x150] sm:$0xff]
    %v280 = vld [vmem:[#allocation2 + $0x158] sm:$0xff]
    %v281 = vld [vmem:[#allocation2 + $0x160] sm:$0xff]
    %v282 = vld [vmem:[#allocation2 + $0x168] sm:$0xff]
    %v283 = vld [vmem:[#allocation2 + $0x170] sm:$0xff]
    %v284 = vld [vmem:[#allocation2 + $0x178] sm:$0xff]
    %v285 = vld [vmem:[#allocation2 + $0x180] sm:$0xff]
    %v286 = vld [vmem:[#allocation2 + $0x188] sm:$0xff]
    %v287 = vld [vmem:[#allocation2 + $0x190] sm:$0xff]
    %v288 = vld [vmem:[#allocation2 + $0x198] sm:$0xff]
    %v289 = vld [vmem:[#allocation2 + $0x1a0] sm:$0xff]
    %v290 = vld [vmem:[#allocation2 + $0x1a8] sm:$0xff]
    %v291 = vld [vmem:[#allocation2 + $0x1b0] sm:$0xff]
    %v292 = vld [vmem:[#allocation2 + $0x1b8] sm:$0xff]
    %v293 = vld [vmem:[#allocation2 + $0x1c0] sm:$0xff]
    %v294 = vld [vmem:[#allocation2 + $0x1c8] sm:$0xff]
    %v295 = vld [vmem:[#allocation2 + $0x1d0] sm:$0xff]
    %v296 = vld [vmem:[#allocation2 + $0x1d8] sm:$0xff]
    %v297 = vld [vmem:[#allocation2 + $0x1e0] sm:$0xff]
    %v298 = vld [vmem:[#allocation2 + $0x1e8] sm:$0xff]
    %v299 = vld [vmem:[#allocation2 + $0x1f0] sm:$0xff]
    %v300 = vld [vmem:[#allocation2 + $0x1f8] sm:$0xff]
    %v301 = vld [vmem:[#allocation2 + $0x200] sm:$0xff]
    %v302 = vld [vmem:[#allocation2 + $0x208] sm:$0xff]
    %v303 = vld [vmem:[#allocation2 + $0x210] sm:$0xff]
    %v304 = vld [vmem:[#allocation2 + $0x218] sm:$0xff]
    %v305 = vld [vmem:[#allocation2 + $0x220] sm:$0xff]
    %v306 = vld [vmem:[#allocation2 + $0x228] sm:$0xff]
    %v307 = vld [vmem:[#allocation2 + $0x230] sm:$0xff]
    %v308 = vld [vmem:[#allocation2 + $0x238] sm:$0xff]
    %v309 = vld [vmem:[#allocation2 + $0x240] sm:$0xff]
    %v310 = vld [vmem:[#allocation2 + $0x248] sm:$0xff]
    %v311 = vld [vmem:[#allocation2 + $0x250] sm:$0xff]
    %v312 = vld [vmem:[#allocation2 + $0x258] sm:$0xff]
    %v313 = vld [vmem:[#allocation2 + $0x260] sm:$0xff]
    %v314 = vld [vmem:[#allocation2 + $0x268] sm:$0xff]
    %v315 = vld [vmem:[#allocation2 + $0x270] sm:$0xff]
    %v316 = vld [vmem:[#allocation2 + $0x278] sm:$0xff]
    %v317 = vld [vmem:[#allocation2 + $0x280] sm:$0xff]
    %v318 = vld [vmem:[#allocation2 + $0x288] sm:$0xff]
    %v319 = vld [vmem:[#allocation2 + $0x290] sm:$0xff]
    %v320 = vld [vmem:[#allocation2 + $0x298] sm:$0xff]
    %v321 = vld [vmem:[#allocation2 + $0x2a0] sm:$0xff]
    %v322 = vld [vmem:[#allocation2 + $0x2a8] sm:$0xff]
    %s323 = scalar_lea.vmem [#allocation2], 1219
    %v324 = vld [vmem:[%s323] ss:$8 sm:$0x3]
    %vm325 = vcmask 523264
    %v327 = vsel %vm325, %v274, 0
    %329 = vmatpush.msra.mxu0 0.0
    %330 = vmatpush.msra.mxu0 0.0
    %331 = vmatpush.msra.mxu0 0.0
    %332 = vmatpush.msra.mxu0 0.0
    %333 = vmatpush.msra.mxu0 0.0
    %334 = vmatpush.msra.mxu0 0.0
    %335 = vmatpush.msra.mxu0 0.0
    %336 = vmatpush.msra.mxu0 0.0
    %337 = vmatpush.msra.mxu0 %v321
    %338 = vmatpush.msra.mxu0 %v319
    %339 = vmatpush.msra.mxu0 %v317
    %340 = vmatpush.msra.mxu0 %v315
    %341 = vmatpush.msra.mxu0 %v313
    %342 = vmatpush.msra.mxu0 %v311
    %343 = vmatpush.msra.mxu0 %v309
    %344 = vmatpush.msra.mxu0 %v307
    %345 = vmatmul.f32.gmra.mxu0 %v327
    %v346 = vpop.f32.mrf.mxu0
    %v347 = vadd.f32 0.0, %v346
    %348 = vdwg.mxu0
    %349 = vmatpush.msra.mxu0 0.0
    %350 = vmatpush.msra.mxu0 0.0
    %351 = vmatpush.msra.mxu0 0.0
    %352 = vmatpush.msra.mxu0 0.0
    %353 = vmatpush.msra.mxu0 0.0
    %354 = vmatpush.msra.mxu0 0.0
    %355 = vmatpush.msra.mxu0 0.0
    %356 = vmatpush.msra.mxu0 0.0
    %357 = vmatpush.msra.mxu0 %v322
    %358 = vmatpush.msra.mxu0 %v320
    %359 = vmatpush.msra.mxu0 %v318
    %360 = vmatpush.msra.mxu0 %v316
    %361 = vmatpush.msra.mxu0 %v314
    %362 = vmatpush.msra.mxu0 %v312
    %363 = vmatpush.msra.mxu0 %v310
    %364 = vmatpush.msra.mxu0 %v308
    %365 = vmatmul.f32.gmra.mxu0 %v327
    %v366 = vpop.f32.mrf.mxu0
    %v367 = vadd.f32 0.0, %v366
    %368 = vdwg.mxu0
    %369 = vmatpush.msra.mxu0 %v305
    %370 = vmatpush.msra.mxu0 %v303
    %371 = vmatpush.msra.mxu0 %v301
    %372 = vmatpush.msra.mxu0 %v299
    %373 = vmatpush.msra.mxu0 %v297
    %374 = vmatpush.msra.mxu0 %v295
    %375 = vmatpush.msra.mxu0 %v293
    %376 = vmatpush.msra.mxu0 %v291
    %377 = vmatpush.msra.mxu0 %v289
    %378 = vmatpush.msra.mxu0 %v287
    %379 = vmatpush.msra.mxu0 %v285
    %380 = vmatpush.msra.mxu0 %v283
    %381 = vmatpush.msra.mxu0 %v281
    %382 = vmatpush.msra.mxu0 %v279
    %383 = vmatpush.msra.mxu0 %v277
    %384 = vmatpush.msra.mxu0 %v275
    %385 = vmatmul.f32.gmra.mxu0 %v203
    %v386 = vpop.f32.mrf.mxu0
    %v387 = vadd.f32 %v347, %v386
    %388 = vdwg.mxu0
    %389 = vmatpush.msra.mxu0 %v306
    %390 = vmatpush.msra.mxu0 %v304
    %391 = vmatpush.msra.mxu0 %v302
    %392 = vmatpush.msra.mxu0 %v300
    %393 = vmatpush.msra.mxu0 %v298
    %394 = vmatpush.msra.mxu0 %v296
    %395 = vmatpush.msra.mxu0 %v294
    %396 = vmatpush.msra.mxu0 %v292
    %397 = vmatpush.msra.mxu0 %v290
    %398 = vmatpush.msra.mxu0 %v288
    %399 = vmatpush.msra.mxu0 %v286
    %400 = vmatpush.msra.mxu0 %v284
    %401 = vmatpush.msra.mxu0 %v282
    %402 = vmatpush.msra.mxu0 %v280
    %403 = vmatpush.msra.mxu0 %v278
    %404 = vmatpush.msra.mxu0 %v276
    %405 = vmatmul.f32.gmra.mxu0 %v203
    %v406 = vpop.f32.mrf.mxu0
    %v407 = vadd.f32 %v367, %v406
    %408 = vdwg.mxu0
    %v410 = vperm.slane %v324, 0
    %v411 = vperm.slane %v324, 1
    %v414 = vadd.f32 %v387, %v410
    %v415 = vadd.f32 %v407, %v411
    %v416 = vmax.f32 %v414, 0.0
    %v417 = vmax.f32 %v415, 0.0
    %v418 = vld [vmem:[#allocation2 + $0x2b0] sm:$0xff]
    %v419 = vld [vmem:[#allocation2 + $0x2c0] sm:$0xff]
    %v420 = vld [vmem:[#allocation2 + $0x2d0] sm:$0xff]
    %v421 = vld [vmem:[#allocation2 + $0x2e0] sm:$0xff]
    %v422 = vld [vmem:[#allocation2 + $0x2f0] sm:$0xff]
    %v423 = vld [vmem:[#allocation2 + $0x300] sm:$0xff]
    %v424 = vld [vmem:[#allocation2 + $0x310] sm:$0xff]
    %v425 = vld [vmem:[#allocation2 + $0x320] sm:$0xff]
    %v426 = vld [vmem:[#allocation2 + $0x330] sm:$0xff]
    %v427 = vld [vmem:[#allocation2 + $0x340] sm:$0xff]
    %v428 = vld [vmem:[#allocation2 + $0x350] sm:$0xff]
    %v429 = vld [vmem:[#allocation2 + $0x360] sm:$0xff]
    %v430 = vld [vmem:[#allocation2 + $0x370] sm:$0xff]
    %v431 = vld [vmem:[#allocation2 + $0x380] sm:$0xff]
    %v432 = vld [vmem:[#allocation2 + $0x390] sm:$0xff]
    %v433 = vld [vmem:[#allocation2 + $0x3a0] sm:$0xff]
    %v434 = vld [vmem:[#allocation2 + $0x3b0] sm:$0xff]
    %v435 = vld [vmem:[#allocation2 + $0x3c0] sm:$0xff]
    %v436 = vld [vmem:[#allocation2 + $0x3d0] sm:$0xff]
    %v437 = vld [vmem:[#allocation2 + $0x3e0] sm:$0xff]
    %v438 = vld [vmem:[#allocation2 + $0x3f0] sm:$0xff]
    %v439 = vld [vmem:[#allocation2 + $0x400] sm:$0xff]
    %v440 = vld [vmem:[#allocation2 + $0x410] sm:$0xff]
    %v441 = vld [vmem:[#allocation2 + $0x420] sm:$0xff]
    %v442 = vld [vmem:[#allocation2 + $0x430] sm:$0xff]
    %v443 = vld [vmem:[#allocation2 + $0x440] sm:$0xff]
    %v444 = vld [vmem:[#allocation2 + $0x450] sm:$0xff]
    %v445 = vld [vmem:[#allocation2 + $0x460] sm:$0xff]
    %v446 = vld [vmem:[#allocation2 + $0x470] sm:$0xff]
    %v447 = vld [vmem:[#allocation2 + $0x480] sm:$0xff]
    %v448 = vld [vmem:[#allocation2 + $0x490] sm:$0xff]
    %v449 = vld [vmem:[#allocation2 + $0x4a0] sm:$0xff]
    %v450 = vld [vmem:[#allocation2 + $0x4c4] ss:$0 sm:$0xff]
    %451 = vmatpush.msra.mxu0 %v433
    %452 = vmatpush.msra.mxu0 %v432
    %453 = vmatpush.msra.mxu0 %v431
    %454 = vmatpush.msra.mxu0 %v430
    %455 = vmatpush.msra.mxu0 %v429
    %456 = vmatpush.msra.mxu0 %v428
    %457 = vmatpush.msra.mxu0 %v427
    %458 = vmatpush.msra.mxu0 %v426
    %459 = vmatpush.msra.mxu0 %v425
    %460 = vmatpush.msra.mxu0 %v424
    %461 = vmatpush.msra.mxu0 %v423
    %462 = vmatpush.msra.mxu0 %v422
    %463 = vmatpush.msra.mxu0 %v421
    %464 = vmatpush.msra.mxu0 %v420
    %465 = vmatpush.msra.mxu0 %v419
    %466 = vmatpush.msra.mxu0 %v418
    %467 = vmatmul.f32.gmra.mxu0 %v416
    %v468 = vpop.f32.mrf.mxu0
    %v469 = vadd.f32 %v450, %v468
    %470 = vdwg.mxu0
    %471 = vmatpush.msra.mxu0 %v449
    %472 = vmatpush.msra.mxu0 %v448
    %473 = vmatpush.msra.mxu0 %v447
    %474 = vmatpush.msra.mxu0 %v446
    %475 = vmatpush.msra.mxu0 %v445
    %476 = vmatpush.msra.mxu0 %v444
    %477 = vmatpush.msra.mxu0 %v443
    %478 = vmatpush.msra.mxu0 %v442
    %479 = vmatpush.msra.mxu0 %v441
    %480 = vmatpush.msra.mxu0 %v440
    %481 = vmatpush.msra.mxu0 %v439
    %482 = vmatpush.msra.mxu0 %v438
    %483 = vmatpush.msra.mxu0 %v437
    %484 = vmatpush.msra.mxu0 %v436
    %485 = vmatpush.msra.mxu0 %v435
    %486 = vmatpush.msra.mxu0 %v434
    %487 = vmatmul.f32.gmra.mxu0 %v417
    %v488 = vpop.f32.mrf.mxu0
    %v489 = vadd.f32 %v469, %v488
    %490 = vdwg.mxu0
    %491 = vst [vmem:[#allocation5] sm:$0x3] %v489
    // Predicated region
    $region18: #{tpu_custom_call.1} parent=1 // pred_check
      _
    $region19: #{tpu_custom_call.1} parent=1 // pred_check_branch
      %493 = sbr.rel (0) target = $region21
    $region20: #{tpu_custom_call.1} parent=1 // pred_region
      %495 = vsyncadd [#allocation4], 0
      %s497 = sshll.u32 [#allocation5], 4
      %s498 = int_to_ptr.vmem [resolvable:$true] %s497
      %s499 = sshll.u32 %s3, 4
      %s500 = int_to_ptr.hbm [resolvable:$true] %s499
      %502 = dma.vmem_to_hbm [thread:$0]  %s498, 32, %s500, [#allocation4]
    $region21: #{tpu_custom_call.1} parent=1 // pred_fallthru
      _
    // Predicated region
    $region22: #{tpu_custom_call.1} parent=1 // pred_check
      _
    $region23: #{tpu_custom_call.1} parent=1 // pred_check_branch
      %504 = sbr.rel (0) target = $region25
    $region24: #{tpu_custom_call.1} parent=1 // pred_region
      %506 = dma.done [#allocation4], 32
    $region25: #{tpu_custom_call.1} parent=1 // pred_fallthru
      _
    %507 = vsyncpa [#allocation3], 1
    %508 = vsyncpa [#allocation4], 1

</llo_original>
